<compile_context>
chip_gen: v5e
topology: v5e:2x2
jax: 0.10.0
libtpu: 0.0.40
codegen_flags: <defaults>
</compile_context>

<pallas_src>
import functools

import jax
import jax.numpy as jnp
from jax.experimental import pallas as pl
from jax.experimental.pallas import tpu as pltpu


def _round_up(a, b):
    return (a + b - 1) // b * b


# ---------------------------------------------------------------------------
# Pass 1: conv-as-matmul (bf16 MXU, f32 accumulator) + streaming BN statistics.
# ---------------------------------------------------------------------------
def conv_stats_kernel(p_ref, w_ref, y_ref, stats_ref, acc_ref):
    i = pl.program_id(0)
    k = pl.program_id(1)
    nk = pl.num_programs(1)

    # Zero the global sum / sumsq accumulator once, at the very first grid step.
    @pl.when((i == 0) & (k == 0))
    def _():
        stats_ref[...] = jnp.zeros_like(stats_ref)

    # Zero the per-M-tile f32 accumulator at the start of each K sweep.
    @pl.when(k == 0)
    def _():
        acc_ref[...] = jnp.zeros_like(acc_ref)

    acc_ref[...] += jnp.dot(
        p_ref[...], w_ref[...], preferred_element_type=jnp.float32
    )

    # Finalize this M tile: write raw conv output and accumulate BN statistics.
    @pl.when(k == nk - 1)
    def _():
        y = acc_ref[...]
        y_ref[...] = y.astype(y_ref.dtype)
        s = jnp.sum(y, axis=0, keepdims=True)        # (1, Cp) channel sums
        sq = jnp.sum(y * y, axis=0, keepdims=True)   # (1, Cp) channel sumsq
        stats_ref[...] = stats_ref[...] + jnp.concatenate([s, sq], axis=0)


# ---------------------------------------------------------------------------
# Pass 2: apply BatchNorm (batch statistics) — elementwise, lane-dense output.
# ---------------------------------------------------------------------------
def bn_apply_kernel(y_ref, stats_ref, gamma_ref, beta_ref, o_ref, *, inv_m, eps):
    mean = stats_ref[0:1, :] * inv_m
    var = stats_ref[1:2, :] * inv_m - mean * mean      # biased variance
    scale = gamma_ref[...] * jax.lax.rsqrt(var + eps)
    shift = beta_ref[...] - mean * scale
    o_ref[...] = (y_ref[...] * scale + shift).astype(o_ref.dtype)


def basic_conv2d(x, weight, gamma, beta, *, stride=1, padding=0, dilation=1,
                 eps=1e-5):
    """x: (N, Cin, H, W) f32; weight: (Cout, Cin, KH, KW); gamma/beta: (Cout,)."""
    N, Cin, H, W = x.shape
    Cout, _, KH, KW = weight.shape

    # --- glue: pad + im2col in NHWC order, emitted directly in bf16 ---------
    xp = jnp.pad(x, ((0, 0), (0, 0), (padding, padding), (padding, padding)))
    Hp, Wp = H + 2 * padding, W + 2 * padding
    Ho = (Hp - dilation * (KH - 1) - 1) // stride + 1
    Wo = (Wp - dilation * (KW - 1) - 1) // stride + 1

    xhwc = jnp.transpose(xp, (0, 2, 3, 1)).astype(jnp.bfloat16)  # (N, Hp, Wp, Cin)
    cols = []
    for ki in range(KH):
        for kj in range(KW):
            hi, wj = ki * dilation, kj * dilation
            cols.append(
                xhwc[:, hi:hi + (Ho - 1) * stride + 1:stride,
                        wj:wj + (Wo - 1) * stride + 1:stride, :]
            )  # each (N, Ho, Wo, Cin)
    # stack -> (N, Ho, Wo, Cin, KH*KW); K order = (cin major, kh, kw) to match
    # weight.reshape(Cout, Cin*KH*KW).
    M, K = N * Ho * Wo, Cin * KH * KW
    patches = jnp.stack(cols, axis=-1).reshape(M, K)             # (M, K) bf16

    # --- lane-dense padding of K / Cout, tile M ------------------------------
    LANE = 128
    Cp = _round_up(Cout, LANE)
    Kp = _round_up(K, LANE)
    TM = 256 if M >= 256 else _round_up(M, 8)
    Mp = _round_up(M, TM)
    TK = min(512, Kp)
    nm, nk = Mp // TM, Kp // TK

    patches = jnp.pad(patches, ((0, Mp - M), (0, Kp - K)))
    w2 = weight.reshape(Cout, K).T.astype(jnp.bfloat16)          # (K, Cout)
    w2 = jnp.pad(w2, ((0, Kp - K), (0, Cp - Cout)))
    g2 = jnp.pad(gamma.astype(jnp.float32).reshape(1, Cout),
                 ((0, 0), (0, Cp - Cout)))
    b2 = jnp.pad(beta.astype(jnp.float32).reshape(1, Cout),
                 ((0, 0), (0, Cp - Cout)))

    # --- pass 1: conv + streaming stats --------------------------------------
    cost1 = pl.CostEstimate(
        flops=2 * Mp * Kp * Cp,
        transcendentals=0,
        bytes_accessed=patches.size * 2 + w2.size * 2 + Mp * Cp * 4 + 2 * Cp * 4,
    )
    y_full, stats = pl.pallas_call(
        conv_stats_kernel,
        out_shape=(
            jax.ShapeDtypeStruct((Mp, Cp), jnp.float32),
            jax.ShapeDtypeStruct((2, Cp), jnp.float32),
        ),
        grid_spec=pltpu.PrefetchScalarGridSpec(
            num_scalar_prefetch=0,
            grid=(nm, nk),
            in_specs=[
                pl.BlockSpec((TM, TK), lambda i, k: (i, k)),
                pl.BlockSpec((TK, Cp), lambda i, k: (k, 0)),
            ],
            out_specs=[
                pl.BlockSpec((TM, Cp), lambda i, k: (i, 0)),
                pl.BlockSpec((2, Cp), lambda i, k: (0, 0)),
            ],
            scratch_shapes=[pltpu.VMEM((TM, Cp), jnp.float32)],
        ),
        compiler_params=pltpu.CompilerParams(
            # M axis must be "arbitrary": the BN-stats accumulator output is
            # carried sequentially across all M tiles.
            dimension_semantics=("arbitrary", "arbitrary"),
            vmem_limit_bytes=32 * 1024 * 1024,
        ),
        cost_estimate=cost1,
    )(patches, w2)

    # --- pass 2: normalize (mem-bound elementwise, parallel over M tiles) ----
    out = pl.pallas_call(
        functools.partial(bn_apply_kernel, inv_m=1.0 / float(M), eps=eps),
        out_shape=jax.ShapeDtypeStruct((Mp, Cp), jnp.float32),
        grid_spec=pltpu.PrefetchScalarGridSpec(
            num_scalar_prefetch=0,
            grid=(nm,),
            in_specs=[
                pl.BlockSpec((TM, Cp), lambda i: (i, 0)),
                pl.BlockSpec((2, Cp), lambda i: (0, 0)),
                pl.BlockSpec((1, Cp), lambda i: (0, 0)),
                pl.BlockSpec((1, Cp), lambda i: (0, 0)),
            ],
            out_specs=pl.BlockSpec((TM, Cp), lambda i: (i, 0)),
        ),
        compiler_params=pltpu.CompilerParams(
            dimension_semantics=("parallel",),
            vmem_limit_bytes=32 * 1024 * 1024,
        ),
    )(y_full, stats, g2, b2)

    out = out[:M, :Cout].reshape(N, Ho, Wo, Cout)
    # TODO(synk): downstream consumers could take NHWC directly and skip this
    # extra transpose (one HBM read+write of the output).
    return jnp.transpose(out, (0, 3, 1, 2))


def _reference(x, weight, gamma, beta, *, stride, padding, dilation, eps=1e-5):
    # Matches the kernel's bf16-operand / f32-accumulate matmul path.
    y = jax.lax.conv_general_dilated(
        x.astype(jnp.bfloat16), weight.astype(jnp.bfloat16),
        window_strides=(stride, stride),
        padding=((padding, padding), (padding, padding)),
        rhs_dilation=(dilation, dilation),
        dimension_numbers=("NCHW", "OIHW", "NCHW"),
        preferred_element_type=jnp.float32,
    )
    mean = jnp.mean(y, axis=(0, 2, 3), keepdims=True)
    var = jnp.mean((y - mean) ** 2, axis=(0, 2, 3), keepdims=True)
    g = gamma.reshape(1, -1, 1, 1)
    b = beta.reshape(1, -1, 1, 1)
    return (y - mean) * jax.lax.rsqrt(var + eps) * g + b


if __name__ == "__main__":
    N, Cin, Cout, H, W = 2, 4, 8, 16, 16
    key = jax.random.PRNGKey(0)
    kx, kw1, kw2, kw3, kg, kb = jax.random.split(key, 6)
    x = jax.random.normal(kx, (N, Cin, H, W), dtype=jnp.float32)
    gamma = 1.0 + 0.1 * jax.random.normal(kg, (Cout,), dtype=jnp.float32)
    beta = 0.1 * jax.random.normal(kb, (Cout,), dtype=jnp.float32)

    # Conv configs used throughout OurNet's BasicConv2d blocks:
    #   3x3 pad=1, 1x1, and 3x3 pad=3 dilation=3 (FeE branch1).
    configs = [(3, 1, 1, 1), (1, 1, 0, 1), (3, 1, 3, 3)]
    wkeys = [kw1, kw2, kw3]
    for (ks, st, pd, dl), wk in zip(configs, wkeys):
        weight = 0.1 * jax.random.normal(wk, (Cout, Cin, ks, ks), dtype=jnp.float32)
        out = basic_conv2d(x, weight, gamma, beta,
                           stride=st, padding=pd, dilation=dl)
        out = jax.block_until_ready(out)
        ref = _reference(x, weight, gamma, beta,
                         stride=st, padding=pd, dilation=dl)
        assert out.shape == ref.shape, (out.shape, ref.shape)
        err = float(jnp.max(jnp.abs(out - ref)))
        assert jnp.allclose(out, ref, atol=1e-2, rtol=1e-2), err

    print("KERNEL_OK")
</pallas_src>

<mosaic_0001>
module attributes {stable_mosaic.version = 11 : i64} {
  func.func @conv_stats_kernel(%arg0: i32, %arg1: i32, %arg2: memref<256x128xbf16, #tpu.memory_space<vmem>>, %arg3: memref<128x128xbf16, #tpu.memory_space<vmem>>, %arg4: memref<256x128xf32, #tpu.memory_space<vmem>>, %arg5: memref<2x128xf32, #tpu.memory_space<vmem>>, %arg6: memref<256x128xf32, #tpu.memory_space<vmem>>) attributes {dimension_semantics = [#tpu.dimension_semantics<arbitrary>, #tpu.dimension_semantics<arbitrary>], iteration_bounds = array<i64: 2, 1>, scalar_prefetch = 0 : i64, scratch_operands = 1 : i64, tpu.core_type = #tpu.core_type<tc>, window_params = [{transform_indices = @transform_0, window_bounds = array<i64: 256, 128>}, {transform_indices = @transform_1, window_bounds = array<i64: 128, 128>}, {transform_indices = @transform_2, window_bounds = array<i64: 256, 128>}, {pipeline_mode = #tpu.pipeline_mode<synchronous>, transform_indices = @transform_3, window_bounds = array<i64: 2, 128>}]} {
    %c0_i32 = arith.constant 0 : i32
    %0 = arith.cmpi eq, %arg0, %c0_i32 : i32
    %c0_i32_0 = arith.constant 0 : i32
    %1 = arith.cmpi eq, %arg1, %c0_i32_0 : i32
    %2 = arith.andi %0, %1 : i1
    %3 = arith.extui %2 : i1 to i32
    %c0_i32_1 = arith.constant 0 : i32
    %4 = arith.cmpi ne, %3, %c0_i32_1 : i32
    scf.if %4 {
      %cst_13 = arith.constant 0.000000e+00 : f32
      %17 = vector.broadcast %cst_13 : f32 to vector<2x128xf32>
      %c0_14 = arith.constant 0 : index
      %c0_15 = arith.constant 0 : index
      %18 = vector.load %arg5[%c0_14, %c0_15] : memref<2x128xf32, #tpu.memory_space<vmem>>, vector<2x128xf32>
      tpu.vector_store %arg5[%c0_14, %c0_15], %17 {strides = array<i32>} : memref<2x128xf32, #tpu.memory_space<vmem>>, vector<2x128xf32>,
    } else {
    }
    %c0_i32_2 = arith.constant 0 : i32
    %5 = arith.cmpi eq, %arg1, %c0_i32_2 : i32
    %6 = arith.extui %5 : i1 to i32
    %c0_i32_3 = arith.constant 0 : i32
    %7 = arith.cmpi ne, %6, %c0_i32_3 : i32
    scf.if %7 {
      %cst_13 = arith.constant 0.000000e+00 : f32
      %17 = vector.broadcast %cst_13 : f32 to vector<256x128xf32>
      %c0_14 = arith.constant 0 : index
      %c0_15 = arith.constant 0 : index
      %18 = vector.load %arg6[%c0_14, %c0_15] : memref<256x128xf32, #tpu.memory_space<vmem>>, vector<256x128xf32>
      tpu.vector_store %arg6[%c0_14, %c0_15], %17 {strides = array<i32>} : memref<256x128xf32, #tpu.memory_space<vmem>>, vector<256x128xf32>,
    } else {
    }
    %c0 = arith.constant 0 : index
    %c0_4 = arith.constant 0 : index
    %8 = vector.load %arg6[%c0, %c0_4] : memref<256x128xf32, #tpu.memory_space<vmem>>, vector<256x128xf32>
    %c0_5 = arith.constant 0 : index
    %c0_6 = arith.constant 0 : index
    %9 = vector.load %arg2[%c0_5, %c0_6] : memref<256x128xbf16, #tpu.memory_space<vmem>>, vector<256x128xbf16>
    %c0_7 = arith.constant 0 : index
    %c0_8 = arith.constant 0 : index
    %10 = vector.load %arg3[%c0_7, %c0_8] : memref<128x128xbf16, #tpu.memory_space<vmem>>, vector<128x128xbf16>
    %cst = arith.constant dense<0.000000e+00> : vector<256x128xf32>
    %11 = tpu.matmul %9, %10, %cst {dimension_numbers = #tpu.dot_dimension_numbers<[1], [0], [0], [1], [0, 0, 1, 1], [], []>} : vector<256x128xbf16>, vector<128x128xbf16>, vector<256x128xf32> -> vector<256x128xf32>
    %12 = arith.addf %8, %11 : vector<256x128xf32>
    %c0_9 = arith.constant 0 : index
    %c0_10 = arith.constant 0 : index
    %13 = vector.load %arg6[%c0_9, %c0_10] : memref<256x128xf32, #tpu.memory_space<vmem>>, vector<256x128xf32>
    tpu.vector_store %arg6[%c0_9, %c0_10], %12 {strides = array<i32>} : memref<256x128xf32, #tpu.memory_space<vmem>>, vector<256x128xf32>,
    %c0_i32_11 = arith.constant 0 : i32
    %14 = arith.cmpi eq, %arg1, %c0_i32_11 : i32
    %15 = arith.extui %14 : i1 to i32
    %c0_i32_12 = arith.constant 0 : i32
    %16 = arith.cmpi ne, %15, %c0_i32_12 : i32
    scf.if %16 {
      %c0_13 = arith.constant 0 : index
      %c0_14 = arith.constant 0 : index
      %17 = vector.load %arg6[%c0_13, %c0_14] : memref<256x128xf32, #tpu.memory_space<vmem>>, vector<256x128xf32>
      %c0_15 = arith.constant 0 : index
      %c0_16 = arith.constant 0 : index
      %18 = vector.load %arg4[%c0_15, %c0_16] : memref<256x128xf32, #tpu.memory_space<vmem>>, vector<256x128xf32>
      tpu.vector_store %arg4[%c0_15, %c0_16], %17 {strides = array<i32>} : memref<256x128xf32, #tpu.memory_space<vmem>>, vector<256x128xf32>,
      %cst_17 = arith.constant dense<0.000000e+00> : vector<128xf32>
      %19 = vector.multi_reduction <add>, %17, %cst_17 [0] : vector<256x128xf32> to vector<128xf32>
      %20 = vector.shape_cast %19 : vector<128xf32> to vector<1x128xf32>
      %21 = arith.mulf %17, %17 : vector<256x128xf32>
      %cst_18 = arith.constant dense<0.000000e+00> : vector<128xf32>
      %22 = vector.multi_reduction <add>, %21, %cst_18 [0] : vector<256x128xf32> to vector<128xf32>
      %23 = vector.shape_cast %22 : vector<128xf32> to vector<1x128xf32>
      %c0_19 = arith.constant 0 : index
      %c0_20 = arith.constant 0 : index
      %24 = vector.load %arg5[%c0_19, %c0_20] : memref<2x128xf32, #tpu.memory_space<vmem>>, vector<2x128xf32>
      %25 = tpu.concatenate %20, %23 in 0 : vector<1x128xf32>, vector<1x128xf32> -> vector<2x128xf32>
      %26 = arith.addf %24, %25 : vector<2x128xf32>
      %c0_21 = arith.constant 0 : index
      %c0_22 = arith.constant 0 : index
      %27 = vector.load %arg5[%c0_21, %c0_22] : memref<2x128xf32, #tpu.memory_space<vmem>>, vector<2x128xf32>
      tpu.vector_store %arg5[%c0_21, %c0_22], %26 {strides = array<i32>} : memref<2x128xf32, #tpu.memory_space<vmem>>, vector<2x128xf32>,
    } else {
    }
    return
  }
  func.func @transform_0(%arg0: i32, %arg1: i32) -> (i32, i32) {
    %c0_i32 = arith.constant 0 : i32
    return %arg0, %arg1 : i32, i32
  }
  func.func @transform_1(%arg0: i32, %arg1: i32) -> (i32, i32) {
    %c0_i32 = arith.constant 0 : i32
    %c0_i32_0 = arith.constant 0 : i32
    return %arg1, %c0_i32 : i32, i32
  }
  func.func @transform_2(%arg0: i32, %arg1: i32) -> (i32, i32) {
    %c0_i32 = arith.constant 0 : i32
    %c0_i32_0 = arith.constant 0 : i32
    return %arg0, %c0_i32 : i32, i32
  }
  func.func @transform_3(%arg0: i32, %arg1: i32) -> (i32, i32) {
    %c0_i32 = arith.constant 0 : i32
    %c0_i32_0 = arith.constant 0 : i32
    %c0_i32_1 = arith.constant 0 : i32
    return %c0_i32, %c0_i32_0 : i32, i32
  }
}

</mosaic_0001>

<llo_original>
// kernel: tpu_custom_call.1
$region0: #{tpu_custom_call.1}
  #allocation0 [shape = 'u32[]', space=smem, size = 0x4, offset = 0x4, fixed_abs, tag = 'smem constant byte address 0x4 - core index']
  #allocation1 [shape = 'u32[72,128]{1,0:T(1,128)}', space=vmem, size = 0x9000, scoped, tag = 'internal scratch']
  #allocation2 [shape = 'f32[256,128]{1,0:T(8,128)}', space=vmem, size = 0x20000, scoped, tag = 'scratch operand']
  %s0 = inlined_call_operand.hbm [shape: bf16[512,128], index: 0, kind: input, shape index: {}]
  %s1 = inlined_call_operand.hbm [shape: bf16[128,128], index: 1, kind: input, shape index: {}]
  %s2 = inlined_call_operand.hbm [shape: f32[512,128], index: 2, kind: output, shape index: {0}]
  %s3 = inlined_call_operand.hbm [shape: f32[2,128], index: 3, kind: output, shape index: {1}]
  %4 = xla_tuple %s2, %s3
  %s5 = sld [smem:[#allocation0]]
  $region69: #{tpu_custom_call.1} parent=0
    _
  %s7 = ssub.s32 1, %s5
  %s8 = scalar_select 0, %s7, %s5
  $region1: #{tpu_custom_call.1} parent=0
    #allocation3 [shape = 'u8[131072]{0}', space=vmem, size = 0x20000, scoped, tag = 'input window, operand 0']
    #allocation4 [shape = 's32[2]{0}', space=sflag, size = 0x8, scoped, tag = 'scoped memory for tpu_custom_call.1']
    #allocation5 [shape = 's32[2]{0}', space=sflag, size = 0x8, scoped, tag = 'scoped memory for tpu_custom_call.1']
    #allocation6 [shape = 'u8[32768]{0}', space=vmem, size = 0x8000, scoped, tag = 'input window, operand 1, single buffered']
    #allocation7 [shape = 's32[1]{0}', space=sflag, size = 0x4, scoped, tag = 'scoped memory for tpu_custom_call.1']
    #allocation8 [shape = 'u8[262144]{0}', space=vmem, size = 0x40000, scoped, tag = 'output window, operand 0']
    #allocation9 [shape = 'u8[1024]{0}', space=vmem, size = 0x400, scoped, tag = 'output window, operand 1, single buffered']
    #allocation10 [shape = 's32[1]{0}', space=sflag, size = 0x4, scoped, tag = 'scoped memory for tpu_custom_call.1']
    %9 = vsyncpa [#allocation4], 0
    %s10 = scalar_lea.sflag [#allocation4], 1
    %11 = vsyncpa %s10, 0
    %12 = vsyncpa [#allocation7], 0
    %13 = vsyncpa [#allocation5], 0
    %s14 = scalar_lea.sflag [#allocation5], 1
    %15 = vsyncpa %s14, 0
    %16 = vsyncpa [#allocation10], 0
    loop: start=0, step=1, limit=4
    $region2: #{tpu_custom_call.1} parent=1 // loop_pre_header
      _
    $region3: #{tpu_custom_call.1} parent=1 // loop_header
      %s18 = sphi 0, %s22
      %p19 = scmp.ge.s32.totalorder %s18, 4
      %s25 = sphi 0, %s37
      %s26 = sphi 0, %s33
      %s27 = sphi 0, %s25
      %s28 = sphi 0, %s26
      %s29 = sphi 0, %s27
      %s30 = sphi 0, %s28
      %s42 = sphi 0, %s44
      %s45 = sphi 0, %s42
      %s46 = sphi 0, %s45
      %s62 = sphi 0, %s46
      %s68 = sphi 0, %s70
      %s71 = sphi 0, %s68
      %s72 = sphi 0, %s71
      %s88 = sphi 0, %s72
      %s94 = sphi 0, %s96
      %s97 = sphi 0, %s94
      %s98 = sphi 0, %s97
      %s114 = sphi 0, %s98
      %s118 = sphi 0, %s118
      %s120 = sphi 0, %s118
      %s121 = sphi 0, %s120
      %s135 = sphi 0, %s121
    $region4: #{tpu_custom_call.1} parent=1 // loop_header_branch
      %21 = sbr.rel (%p19) target = $region8
    $region5: #{tpu_custom_call.1} parent=1 // loop_body
      %s23 = ssub.s32 %s18, 1
      %s24 = ssub.s32 %s18, 2
      %s31 = sadd.s32 1, %s26
      %p32 = scmp.ge.s32.totalorder %s31, 1
      %s33 = scalar_select %p32, 0, %s31
      %s34 = sadd.s32 1, %s25
      %s35 = scalar_select %p32, %s34, %s25
      %p36 = scmp.ge.s32.totalorder %s35, 2
      %s37 = scalar_select %p36, 0, %s35
      %s38 = ssub.s32 %s25, %s37
      %s39 = ssub.s32 %s26, %s33
      %s40 = sor.u32 %s38, %s39
      %p41 = scmp.eq.s32.totalorder %s40, 0
      %s43 = sadd.s32 %s42, 1
      %s44 = scalar_select %p41, %s42, %s43
      %p47 = pneg %p41
      %p48 = scmp.eq.s32.totalorder %s18, 1
      %p49 = por %p47, %p48
      %p50 = scmp.ne.s32.totalorder %s42, %s45
      %p51 = scmp.eq.s32.totalorder %s18, 0
      %p52 = por %p50, %p51
      %p53 = scmp.ne.s32.totalorder %s42, %s45
      %p54 = scmp.eq.s32.totalorder %s23, 1
      %p55 = por %p53, %p54
      %p56 = scmp.ne.s32.totalorder %s45, %s46
      %p57 = scmp.eq.s32.totalorder %s23, 0
      %p58 = por %p56, %p57
      %p59 = scmp.ne.s32.totalorder %s45, %s46
      %p60 = scmp.eq.s32.totalorder %s24, 1
      %p61 = por %p59, %p60
      %p63 = scmp.ne.s32.totalorder %s46, %s62
      %p64 = scmp.eq.s32.totalorder %s24, 0
      %p65 = por %p63, %p64
      %s66 = ssub.s32 %s26, %s33
      %p67 = scmp.eq.s32.totalorder %s66, 0
      %s69 = sadd.s32 %s68, 1
      %s70 = scalar_select %p67, %s68, %s69
      %p73 = pneg %p67
      %p74 = scmp.eq.s32.totalorder %s18, 1
      %p75 = por %p73, %p74
      %p76 = scmp.ne.s32.totalorder %s68, %s71
      %p77 = scmp.eq.s32.totalorder %s18, 0
      %p78 = por %p76, %p77
      %p79 = scmp.ne.s32.totalorder %s68, %s71
      %p80 = scmp.eq.s32.totalorder %s23, 1
      %p81 = por %p79, %p80
      %p82 = scmp.ne.s32.totalorder %s71, %s72
      %p83 = scmp.eq.s32.totalorder %s23, 0
      %p84 = por %p82, %p83
      %p85 = scmp.ne.s32.totalorder %s71, %s72
      %p86 = scmp.eq.s32.totalorder %s24, 1
      %p87 = por %p85, %p86
      %p89 = scmp.ne.s32.totalorder %s72, %s88
      %p90 = scmp.eq.s32.totalorder %s24, 0
      %p91 = por %p89, %p90
      %s92 = ssub.s32 %s25, %s37
      %p93 = scmp.eq.s32.totalorder %s92, 0
      %s95 = sadd.s32 %s94, 1
      %s96 = scalar_select %p93, %s94, %s95
      %p99 = pneg %p93
      %p100 = scmp.eq.s32.totalorder %s18, 1
      %p101 = por %p99, %p100
      %p102 = scmp.ne.s32.totalorder %s94, %s97
      %p103 = scmp.eq.s32.totalorder %s18, 0
      %p104 = por %p102, %p103
      %p105 = scmp.ne.s32.totalorder %s94, %s97
      %p106 = scmp.eq.s32.totalorder %s23, 1
      %p107 = por %p105, %p106
      %p108 = scmp.ne.s32.totalorder %s97, %s98
      %p109 = scmp.eq.s32.totalorder %s23, 0
      %p110 = por %p108, %p109
      %p111 = scmp.ne.s32.totalorder %s97, %s98
      %p112 = scmp.eq.s32.totalorder %s24, 1
      %p113 = por %p111, %p112
      %p115 = scmp.ne.s32.totalorder %s98, %s114
      %p116 = scmp.eq.s32.totalorder %s24, 0
      %p117 = por %p115, %p116
      %s119 = sadd.s32 %s118, 1
      %p122 = scmp.eq.s32.totalorder %s18, 1
      %p123 = scmp.ne.s32.totalorder %s118, %s120
      %p124 = scmp.eq.s32.totalorder %s18, 0
      %p125 = por %p123, %p124
      %p126 = scmp.ne.s32.totalorder %s118, %s120
      %p127 = scmp.eq.s32.totalorder %s23, 1
      %p128 = por %p126, %p127
      %p129 = scmp.ne.s32.totalorder %s120, %s121
      %p130 = scmp.eq.s32.totalorder %s23, 0
      %p131 = por %p129, %p130
      %p132 = scmp.ne.s32.totalorder %s120, %s121
      %p133 = scmp.eq.s32.totalorder %s24, 1
      %p134 = por %p132, %p133
      %p136 = scmp.ne.s32.totalorder %s121, %s135
      %p137 = scmp.eq.s32.totalorder %s24, 0
      %p138 = por %p136, %p137
      %p139 = scmp.le.s32.totalorder 1, %s18
      %p140 = scmp.lt.s32.totalorder %s18, 3
      %p141 = pnand %p139, %p140
      %p142 = pneg %p141
      // Predicated region
      $region9: #{tpu_custom_call.1} parent=5 // pred_check
        _
      $region10: #{tpu_custom_call.1} parent=5 // pred_check_branch
        %144 = sbr.rel (%p141) target = $region12
      $region11: #{tpu_custom_call.1} parent=5 // pred_region
        %s145 = ssub.s32 %s18, 1
        // Predicated region
        $region13: #{tpu_custom_call.1} parent=11 // pred_check
          %p146 = pneg %p84
        $region14: #{tpu_custom_call.1} parent=11 // pred_check_branch
          %148 = sbr.rel (%p146) target = $region16
        $region15: #{tpu_custom_call.1} parent=11 // pred_region
          %s149 = smul.u32 16, %s28
          %151 = vsyncadd [#allocation7], 0
          %s152 = smul.addr %s149, 4
          %s153 = scalar_lea.hbm %s1, %s152
          %s154 = sshll.u32 %s153, 4
          %s155 = int_to_ptr.hbm [resolvable:$true] %s154
          %s156 = sshll.u32 [#allocation6], 4
          %s157 = int_to_ptr.vmem [resolvable:$true] %s156
          %162 = dma.hbm_to_vmem [thread:$0]  %s155, 1024, %s157, [#allocation7], 64, 64, 4
        $region16: #{tpu_custom_call.1} parent=11 // pred_fallthru
          _
      $region12: #{tpu_custom_call.1} parent=5 // pred_fallthru
        _
      %p163 = scmp.lt.s32.totalorder %s18, 2
      // Predicated region
      $region17: #{tpu_custom_call.1} parent=5 // pred_check
        %p164 = pneg %p163
      $region18: #{tpu_custom_call.1} parent=5 // pred_check_branch
        %166 = sbr.rel (%p164) target = $region20
      $region19: #{tpu_custom_call.1} parent=5 // pred_region
        // Predicated region
        $region21: #{tpu_custom_call.1} parent=19 // pred_check
          %p167 = pneg %p52
        $region22: #{tpu_custom_call.1} parent=19 // pred_check_branch
          %169 = sbr.rel (%p167) target = $region24
        $region23: #{tpu_custom_call.1} parent=19 // pred_region
          %s170 = sand.u32 %s42, 1
          %s171 = scalar_lea.sflag [#allocation4], %s170
          %s172 = sand.u32 %s42, 1
          %s173 = smul.addr %s172, 128
          %s174 = scalar_lea.vmem [#allocation3], %s173
          %s175 = smul.u32 32, %s25
          %177 = vsyncadd %s171, 0
          %s178 = sadd.s32 %s26, %s175
          %s179 = smul.addr %s178, 4
          %s180 = scalar_lea.hbm %s0, %s179
          %s181 = sshll.u32 %s180, 4
          %s182 = int_to_ptr.hbm [resolvable:$true] %s181
          %s183 = sshll.u32 %s174, 4
          %s184 = int_to_ptr.vmem [resolvable:$true] %s183
          %189 = dma.hbm_to_vmem [thread:$0]  %s182, 2048, %s184, %s171, 64, 64, 4
        $region24: #{tpu_custom_call.1} parent=19 // pred_fallthru
          _
      $region20: #{tpu_custom_call.1} parent=5 // pred_fallthru
        _
      %p190 = scmp.le.s32.totalorder 1, %s18
      %p191 = scmp.lt.s32.totalorder %s18, 3
      %p192 = pnand %p190, %p191
      %p193 = pneg %p192
      // Predicated region
      $region25: #{tpu_custom_call.1} parent=5 // pred_check
        _
      $region26: #{tpu_custom_call.1} parent=5 // pred_check_branch
        %195 = sbr.rel (%p192) target = $region28
      $region27: #{tpu_custom_call.1} parent=5 // pred_region
        %s196 = ssub.s32 %s18, 1
        %s197 = sand.u32 %s45, 1
        %s198 = scalar_lea.sflag [#allocation4], %s197
        %s199 = sand.u32 %s45, 1
        %s200 = smul.addr %s199, 128
        %s201 = scalar_lea.vmem [#allocation3], %s200
        // Predicated region
        $region29: #{tpu_custom_call.1} parent=27 // pred_check
          %p202 = pneg %p58
        $region30: #{tpu_custom_call.1} parent=27 // pred_check_branch
          %204 = sbr.rel (%p202) target = $region32
        $region31: #{tpu_custom_call.1} parent=27 // pred_region
          %206 = dma.done %s198, 2048
        $region32: #{tpu_custom_call.1} parent=27 // pred_fallthru
          _
        // Predicated region
        $region33: #{tpu_custom_call.1} parent=27 // pred_check
          %p207 = pneg %p84
        $region34: #{tpu_custom_call.1} parent=27 // pred_check_branch
          %209 = sbr.rel (%p207) target = $region36
        $region35: #{tpu_custom_call.1} parent=27 // pred_region
          %211 = dma.done [#allocation7], 1024
        $region36: #{tpu_custom_call.1} parent=27 // pred_fallthru
          _
        %s212 = sand.u32 %s45, 1
        %s213 = scalar_lea.sflag [#allocation4], %s212
        %s214 = sand.u32 %s45, 1
        %s215 = smul.addr %s214, 128
        %s216 = scalar_lea.vmem [#allocation3], %s215
        %p217 = pneg %p58
        %p218 = pneg %p55
        %p219 = pneg %p84
        %p220 = pneg %p81
        %p221 = pneg %p110
        %p222 = pneg %p107
        %s223 = sand.u32 %s97, 1
        %s224 = scalar_lea.sflag [#allocation5], %s223
        %s225 = sand.u32 %s97, 1
        %s226 = smul.addr %s225, 256
        %s227 = scalar_lea.vmem [#allocation8], %s226
        %p228 = pneg %p131
        %p229 = pneg %p128
        %s230 = smul.u32 32, %s27
        %s231 = smul.u32 16, %s28
        %s232 = smul.u32 32, %s27
        %p233 = scmp.eq.s32.totalorder %s27, 0
        %p234 = scmp.eq.s32.totalorder %s28, 0
        %p235 = pnand %p233, %p234
        %p236 = pneg %p235
        // Predicated region
        $region37: #{tpu_custom_call.1} parent=27 // pred_check
          _
        $region38: #{tpu_custom_call.1} parent=27 // pred_check_branch
          %238 = sbr.rel (%p235) target = $region40
        $region39: #{tpu_custom_call.1} parent=27 // pred_region
          %239 = vst [vmem:[#allocation9] sm:$0x3] 0.0
        $region40: #{tpu_custom_call.1} parent=27 // pred_fallthru
          _
        // Predicated region
        $region41: #{tpu_custom_call.1} parent=27 // pred_check
          %p240 = pneg %p234
        $region42: #{tpu_custom_call.1} parent=27 // pred_check_branch
          %242 = sbr.rel (%p240) target = $region44
        $region43: #{tpu_custom_call.1} parent=27 // pred_region
          %243 = vst [vmem:[#allocation2] sm:$0xff] 0.0
          %244 = vst [vmem:[#allocation2 + $0x8] sm:$0xff] 0.0
          %245 = vst [vmem:[#allocation2 + $0x10] sm:$0xff] 0.0
          %246 = vst [vmem:[#allocation2 + $0x18] sm:$0xff] 0.0
          %247 = vst [vmem:[#allocation2 + $0x20] sm:$0xff] 0.0
          %248 = vst [vmem:[#allocation2 + $0x28] sm:$0xff] 0.0
          %249 = vst [vmem:[#allocation2 + $0x30] sm:$0xff] 0.0
          %250 = vst [vmem:[#allocation2 + $0x38] sm:$0xff] 0.0
          %251 = vst [vmem:[#allocation2 + $0x40] sm:$0xff] 0.0
          %252 = vst [vmem:[#allocation2 + $0x48] sm:$0xff] 0.0
          %253 = vst [vmem:[#allocation2 + $0x50] sm:$0xff] 0.0
          %254 = vst [vmem:[#allocation2 + $0x58] sm:$0xff] 0.0
          %255 = vst [vmem:[#allocation2 + $0x60] sm:$0xff] 0.0
          %256 = vst [vmem:[#allocation2 + $0x68] sm:$0xff] 0.0
          %257 = vst [vmem:[#allocation2 + $0x70] sm:$0xff] 0.0
          %258 = vst [vmem:[#allocation2 + $0x78] sm:$0xff] 0.0
          %259 = vst [vmem:[#allocation2 + $0x80] sm:$0xff] 0.0
          %260 = vst [vmem:[#allocation2 + $0x88] sm:$0xff] 0.0
          %261 = vst [vmem:[#allocation2 + $0x90] sm:$0xff] 0.0
          %262 = vst [vmem:[#allocation2 + $0x98] sm:$0xff] 0.0
          %263 = vst [vmem:[#allocation2 + $0xa0] sm:$0xff] 0.0
          %264 = vst [vmem:[#allocation2 + $0xa8] sm:$0xff] 0.0
          %265 = vst [vmem:[#allocation2 + $0xb0] sm:$0xff] 0.0
          %266 = vst [vmem:[#allocation2 + $0xb8] sm:$0xff] 0.0
          %267 = vst [vmem:[#allocation2 + $0xc0] sm:$0xff] 0.0
          %268 = vst [vmem:[#allocation2 + $0xc8] sm:$0xff] 0.0
          %269 = vst [vmem:[#allocation2 + $0xd0] sm:$0xff] 0.0
          %270 = vst [vmem:[#allocation2 + $0xd8] sm:$0xff] 0.0
          %271 = vst [vmem:[#allocation2 + $0xe0] sm:$0xff] 0.0
          %272 = vst [vmem:[#allocation2 + $0xe8] sm:$0xff] 0.0
          %273 = vst [vmem:[#allocation2 + $0xf0] sm:$0xff] 0.0
          %274 = vst [vmem:[#allocation2 + $0xf8] sm:$0xff] 0.0
        $region44: #{tpu_custom_call.1} parent=27 // pred_fallthru
          _
        %v275 = vld [vmem:[#allocation2] sm:$0xff]
        %v276 = vld [vmem:[#allocation2 + $0x8] sm:$0xff]
        %v277 = vld [vmem:[#allocation2 + $0x10] sm:$0xff]
        %v278 = vld [vmem:[#allocation2 + $0x18] sm:$0xff]
        %v279 = vld [vmem:[#allocation2 + $0x20] sm:$0xff]
        %v280 = vld [vmem:[#allocation2 + $0x28] sm:$0xff]
        %v281 = vld [vmem:[#allocation2 + $0x30] sm:$0xff]
        %v282 = vld [vmem:[#allocation2 + $0x38] sm:$0xff]
        %v283 = vld [vmem:[#allocation2 + $0x40] sm:$0xff]
        %v284 = vld [vmem:[#allocation2 + $0x48] sm:$0xff]
        %v285 = vld [vmem:[#allocation2 + $0x50] sm:$0xff]
        %v286 = vld [vmem:[#allocation2 + $0x58] sm:$0xff]
        %v287 = vld [vmem:[#allocation2 + $0x60] sm:$0xff]
        %v288 = vld [vmem:[#allocation2 + $0x68] sm:$0xff]
        %v289 = vld [vmem:[#allocation2 + $0x70] sm:$0xff]
        %v290 = vld [vmem:[#allocation2 + $0x78] sm:$0xff]
        %v291 = vld [vmem:[#allocation2 + $0x80] sm:$0xff]
        %v292 = vld [vmem:[#allocation2 + $0x88] sm:$0xff]
        %v293 = vld [vmem:[#allocation2 + $0x90] sm:$0xff]
        %v294 = vld [vmem:[#allocation2 + $0x98] sm:$0xff]
        %v295 = vld [vmem:[#allocation2 + $0xa0] sm:$0xff]
        %v296 = vld [vmem:[#allocation2 + $0xa8] sm:$0xff]
        %v297 = vld [vmem:[#allocation2 + $0xb0] sm:$0xff]
        %v298 = vld [vmem:[#allocation2 + $0xb8] sm:$0xff]
        %v299 = vld [vmem:[#allocation2 + $0xc0] sm:$0xff]
        %v300 = vld [vmem:[#allocation2 + $0xc8] sm:$0xff]
        %v301 = vld [vmem:[#allocation2 + $0xd0] sm:$0xff]
        %v302 = vld [vmem:[#allocation2 + $0xd8] sm:$0xff]
        %v303 = vld [vmem:[#allocation2 + $0xe0] sm:$0xff]
        %v304 = vld [vmem:[#allocation2 + $0xe8] sm:$0xff]
        %v305 = vld [vmem:[#allocation2 + $0xf0] sm:$0xff]
        %v306 = vld [vmem:[#allocation2 + $0xf8] sm:$0xff]
        %v307 = vld [vmem:[%s201] sm:$0xf]
        %v308 = vld [vmem:[%s201 + $0x4] sm:$0xf]
        %v309 = vld [vmem:[%s201 + $0x8] sm:$0xf]
        %v310 = vld [vmem:[%s201 + $0xc] sm:$0xf]
        %v311 = vld [vmem:[%s201 + $0x10] sm:$0xf]
        %v312 = vld [vmem:[%s201 + $0x14] sm:$0xf]
        %v313 = vld [vmem:[%s201 + $0x18] sm:$0xf]
        %v314 = vld [vmem:[%s201 + $0x1c] sm:$0xf]
        %v315 = vld [vmem:[%s201 + $0x20] sm:$0xf]
        %v316 = vld [vmem:[%s201 + $0x24] sm:$0xf]
        %v317 = vld [vmem:[%s201 + $0x28] sm:$0xf]
        %v318 = vld [vmem:[%s201 + $0x2c] sm:$0xf]
        %v319 = vld [vmem:[%s201 + $0x30] sm:$0xf]
        %v320 = vld [vmem:[%s201 + $0x34] sm:$0xf]
        %v321 = vld [vmem:[%s201 + $0x38] sm:$0xf]
        %v322 = vld [vmem:[%s201 + $0x3c] sm:$0xf]
        %v323 = vld [vmem:[%s201 + $0x40] sm:$0xf]
        %v324 = vld [vmem:[%s201 + $0x44] sm:$0xf]
        %v325 = vld [vmem:[%s201 + $0x48] sm:$0xf]
        %v326 = vld [vmem:[%s201 + $0x4c] sm:$0xf]
        %v327 = vld [vmem:[%s201 + $0x50] sm:$0xf]
        %v328 = vld [vmem:[%s201 + $0x54] sm:$0xf]
        %v329 = vld [vmem:[%s201 + $0x58] sm:$0xf]
        %v330 = vld [vmem:[%s201 + $0x5c] sm:$0xf]
        %v331 = vld [vmem:[%s201 + $0x60] sm:$0xf]
        %v332 = vld [vmem:[%s201 + $0x64] sm:$0xf]
        %v333 = vld [vmem:[%s201 + $0x68] sm:$0xf]
        %v334 = vld [vmem:[%s201 + $0x6c] sm:$0xf]
        %v335 = vld [vmem:[%s201 + $0x70] sm:$0xf]
        %v336 = vld [vmem:[%s201 + $0x74] sm:$0xf]
        %v337 = vld [vmem:[%s201 + $0x78] sm:$0xf]
        %v338 = vld [vmem:[%s201 + $0x7c] sm:$0xf]
        %v339 = vld [vmem:[#allocation6] sm:$0xf]
        %v340 = vld [vmem:[#allocation6 + $0x4] sm:$0xf]
        %v341 = vld [vmem:[#allocation6 + $0x8] sm:$0xf]
        %v342 = vld [vmem:[#allocation6 + $0xc] sm:$0xf]
        %v343 = vld [vmem:[#allocation6 + $0x10] sm:$0xf]
        %v344 = vld [vmem:[#allocation6 + $0x14] sm:$0xf]
        %v345 = vld [vmem:[#allocation6 + $0x18] sm:$0xf]
        %v346 = vld [vmem:[#allocation6 + $0x1c] sm:$0xf]
        %v347 = vld [vmem:[#allocation6 + $0x20] sm:$0xf]
        %v348 = vld [vmem:[#allocation6 + $0x24] sm:$0xf]
        %v349 = vld [vmem:[#allocation6 + $0x28] sm:$0xf]
        %v350 = vld [vmem:[#allocation6 + $0x2c] sm:$0xf]
        %v351 = vld [vmem:[#allocation6 + $0x30] sm:$0xf]
        %v352 = vld [vmem:[#allocation6 + $0x34] sm:$0xf]
        %v353 = vld [vmem:[#allocation6 + $0x38] sm:$0xf]
        %v354 = vld [vmem:[#allocation6 + $0x3c] sm:$0xf]
        %v387 = vunpack.c.l.b16 %v307
        %v388 = vunpack.c.l.b16 %v308
        %v389 = vunpack.c.l.b16 %v309
        %v390 = vunpack.c.l.b16 %v310
        %v391 = vunpack.c.l.b16 %v311
        %v392 = vunpack.c.l.b16 %v312
        %v393 = vunpack.c.l.b16 %v313
        %v394 = vunpack.c.l.b16 %v314
        %v395 = vunpack.c.l.b16 %v315
        %v396 = vunpack.c.l.b16 %v316
        %v397 = vunpack.c.l.b16 %v317
        %v398 = vunpack.c.l.b16 %v318
        %v399 = vunpack.c.l.b16 %v319
        %v400 = vunpack.c.l.b16 %v320
        %v401 = vunpack.c.l.b16 %v321
        %v402 = vunpack.c.l.b16 %v322
        %v403 = vunpack.c.l.b16 %v323
        %v404 = vunpack.c.l.b16 %v324
        %v405 = vunpack.c.l.b16 %v325
        %v406 = vunpack.c.l.b16 %v326
        %v407 = vunpack.c.l.b16 %v327
        %v408 = vunpack.c.l.b16 %v328
        %v409 = vunpack.c.l.b16 %v329
        %v410 = vunpack.c.l.b16 %v330
        %v411 = vunpack.c.l.b16 %v331
        %v412 = vunpack.c.l.b16 %v332
        %v413 = vunpack.c.l.b16 %v333
        %v414 = vunpack.c.l.b16 %v334
        %v415 = vunpack.c.l.b16 %v335
        %v416 = vunpack.c.l.b16 %v336
        %v417 = vunpack.c.l.b16 %v337
        %v418 = vunpack.c.l.b16 %v338
        %v419 = vpack.c.b16 %v388, %v387
        %v420 = vpack.c.b16 %v390, %v389
        %v421 = vpack.c.b16 %v392, %v391
        %v422 = vpack.c.b16 %v394, %v393
        %v423 = vpack.c.b16 %v396, %v395
        %v424 = vpack.c.b16 %v398, %v397
        %v425 = vpack.c.b16 %v400, %v399
        %v426 = vpack.c.b16 %v402, %v401
        %v427 = vpack.c.b16 %v404, %v403
        %v428 = vpack.c.b16 %v406, %v405
        %v429 = vpack.c.b16 %v408, %v407
        %v430 = vpack.c.b16 %v410, %v409
        %v431 = vpack.c.b16 %v412, %v411
        %v432 = vpack.c.b16 %v414, %v413
        %v433 = vpack.c.b16 %v416, %v415
        %v434 = vpack.c.b16 %v418, %v417
        %v467 = vunpack.c.l.b16 %v339
        %v468 = vunpack.c.l.b16 %v340
        %v469 = vunpack.c.l.b16 %v341
        %v470 = vunpack.c.l.b16 %v342
        %v471 = vunpack.c.l.b16 %v343
        %v472 = vunpack.c.l.b16 %v344
        %v473 = vunpack.c.l.b16 %v345
        %v474 = vunpack.c.l.b16 %v346
        %v475 = vunpack.c.l.b16 %v347
        %v476 = vunpack.c.l.b16 %v348
        %v477 = vunpack.c.l.b16 %v349
        %v478 = vunpack.c.l.b16 %v350
        %v479 = vunpack.c.l.b16 %v351
        %v480 = vunpack.c.l.b16 %v352
        %v481 = vunpack.c.l.b16 %v353
        %v482 = vunpack.c.l.b16 %v354
        %v483 = vpack.c.b16 %v468, %v467
        %v484 = vpack.c.b16 %v470, %v469
        %v485 = vpack.c.b16 %v472, %v471
        %v486 = vpack.c.b16 %v474, %v473
        %v487 = vpack.c.b16 %v476, %v475
        %v488 = vpack.c.b16 %v478, %v477
        %v489 = vpack.c.b16 %v480, %v479
        %v490 = vpack.c.b16 %v482, %v481
        %499 = vmatpush.bf16.msra.mxu0 %v490
        %500 = vmatpush.bf16.msra.mxu0 %v489
        %501 = vmatpush.bf16.msra.mxu0 %v488
        %502 = vmatpush.bf16.msra.mxu0 %v487
        %503 = vmatpush.bf16.msra.mxu0 %v486
        %504 = vmatpush.bf16.msra.mxu0 %v485
        %505 = vmatpush.bf16.msra.mxu0 %v484
        %506 = vmatpush.bf16.msra.mxu0 %v483
        %507 = vmatmul.bf16.gmra.mxu0 %v419
        %v508 = vpop.f32.mrf.mxu0
        %v509 = vadd.f32 0.0, %v508
        %v510 = vpop.f32.mrf.mxu0
        %v511 = vadd.f32 0.0, %v510
        %512 = vmatmul.bf16.gmra.mxu0 %v420
        %v513 = vpop.f32.mrf.mxu0
        %v514 = vadd.f32 0.0, %v513
        %v515 = vpop.f32.mrf.mxu0
        %v516 = vadd.f32 0.0, %v515
        %517 = vmatmul.bf16.gmra.mxu0 %v421
        %v518 = vpop.f32.mrf.mxu0
        %v519 = vadd.f32 0.0, %v518
        %v520 = vpop.f32.mrf.mxu0
        %v521 = vadd.f32 0.0, %v520
        %522 = vmatmul.bf16.gmra.mxu0 %v422
        %v523 = vpop.f32.mrf.mxu0
        %v524 = vadd.f32 0.0, %v523
        %v525 = vpop.f32.mrf.mxu0
        %v526 = vadd.f32 0.0, %v525
        %527 = vmatmul.bf16.gmra.mxu0 %v423
        %v528 = vpop.f32.mrf.mxu0
        %v529 = vadd.f32 0.0, %v528
        %v530 = vpop.f32.mrf.mxu0
        %v531 = vadd.f32 0.0, %v530
        %532 = vmatmul.bf16.gmra.mxu0 %v424
        %v533 = vpop.f32.mrf.mxu0
        %v534 = vadd.f32 0.0, %v533
        %v535 = vpop.f32.mrf.mxu0
        %v536 = vadd.f32 0.0, %v535
        %537 = vmatmul.bf16.gmra.mxu0 %v425
        %v538 = vpop.f32.mrf.mxu0
        %v539 = vadd.f32 0.0, %v538
        %v540 = vpop.f32.mrf.mxu0
        %v541 = vadd.f32 0.0, %v540
        %542 = vmatmul.bf16.gmra.mxu0 %v426
        %v543 = vpop.f32.mrf.mxu0
        %v544 = vadd.f32 0.0, %v543
        %v545 = vpop.f32.mrf.mxu0
        %v546 = vadd.f32 0.0, %v545
        %547 = vmatmul.bf16.gmra.mxu0 %v427
        %v548 = vpop.f32.mrf.mxu0
        %v549 = vadd.f32 0.0, %v548
        %v550 = vpop.f32.mrf.mxu0
        %v551 = vadd.f32 0.0, %v550
        %552 = vmatmul.bf16.gmra.mxu0 %v428
        %v553 = vpop.f32.mrf.mxu0
        %v554 = vadd.f32 0.0, %v553
        %v555 = vpop.f32.mrf.mxu0
        %v556 = vadd.f32 0.0, %v555
        %557 = vmatmul.bf16.gmra.mxu0 %v429
        %v558 = vpop.f32.mrf.mxu0
        %v559 = vadd.f32 0.0, %v558
        %v560 = vpop.f32.mrf.mxu0
        %v561 = vadd.f32 0.0, %v560
        %562 = vmatmul.bf16.gmra.mxu0 %v430
        %v563 = vpop.f32.mrf.mxu0
        %v564 = vadd.f32 0.0, %v563
        %v565 = vpop.f32.mrf.mxu0
        %v566 = vadd.f32 0.0, %v565
        %567 = vmatmul.bf16.gmra.mxu0 %v431
        %v568 = vpop.f32.mrf.mxu0
        %v569 = vadd.f32 0.0, %v568
        %v570 = vpop.f32.mrf.mxu0
        %v571 = vadd.f32 0.0, %v570
        %572 = vmatmul.bf16.gmra.mxu0 %v432
        %v573 = vpop.f32.mrf.mxu0
        %v574 = vadd.f32 0.0, %v573
        %v575 = vpop.f32.mrf.mxu0
        %v576 = vadd.f32 0.0, %v575
        %577 = vmatmul.bf16.gmra.mxu0 %v433
        %v578 = vpop.f32.mrf.mxu0
        %v579 = vadd.f32 0.0, %v578
        %v580 = vpop.f32.mrf.mxu0
        %v581 = vadd.f32 0.0, %v580
        %582 = vmatmul.bf16.gmra.mxu0 %v434
        %v583 = vpop.f32.mrf.mxu0
        %v584 = vadd.f32 0.0, %v583
        %v585 = vpop.f32.mrf.mxu0
        %v586 = vadd.f32 0.0, %v585
        %587 = vdwg.mxu0
        %v588 = vadd.f32 %v275, %v509
        %v589 = vadd.f32 %v276, %v511
        %v590 = vadd.f32 %v277, %v514
        %v591 = vadd.f32 %v278, %v516
        %v592 = vadd.f32 %v279, %v519
        %v593 = vadd.f32 %v280, %v521
        %v594 = vadd.f32 %v281, %v524
        %v595 = vadd.f32 %v282, %v526
        %v596 = vadd.f32 %v283, %v529
        %v597 = vadd.f32 %v284, %v531
        %v598 = vadd.f32 %v285, %v534
        %v599 = vadd.f32 %v286, %v536
        %v600 = vadd.f32 %v287, %v539
        %v601 = vadd.f32 %v288, %v541
        %v602 = vadd.f32 %v289, %v544
        %v603 = vadd.f32 %v290, %v546
        %v604 = vadd.f32 %v291, %v549
        %v605 = vadd.f32 %v292, %v551
        %v606 = vadd.f32 %v293, %v554
        %v607 = vadd.f32 %v294, %v556
        %v608 = vadd.f32 %v295, %v559
        %v609 = vadd.f32 %v296, %v561
        %v610 = vadd.f32 %v297, %v564
        %v611 = vadd.f32 %v298, %v566
        %v612 = vadd.f32 %v299, %v569
        %v613 = vadd.f32 %v300, %v571
        %v614 = vadd.f32 %v301, %v574
        %v615 = vadd.f32 %v302, %v576
        %v616 = vadd.f32 %v303, %v579
        %v617 = vadd.f32 %v304, %v581
        %v618 = vadd.f32 %v305, %v584
        %v619 = vadd.f32 %v306, %v586
        %620 = vst [vmem:[#allocation2] sm:$0xff] %v588
        %621 = vst [vmem:[#allocation2 + $0x8] sm:$0xff] %v589
        %622 = vst [vmem:[#allocation2 + $0x10] sm:$0xff] %v590
        %623 = vst [vmem:[#allocation2 + $0x18] sm:$0xff] %v591
        %624 = vst [vmem:[#allocation2 + $0x20] sm:$0xff] %v592
        %625 = vst [vmem:[#allocation2 + $0x28] sm:$0xff] %v593
        %626 = vst [vmem:[#allocation2 + $0x30] sm:$0xff] %v594
        %627 = vst [vmem:[#allocation2 + $0x38] sm:$0xff] %v595
        %628 = vst [vmem:[#allocation2 + $0x40] sm:$0xff] %v596
        %629 = vst [vmem:[#allocation2 + $0x48] sm:$0xff] %v597
        %630 = vst [vmem:[#allocation2 + $0x50] sm:$0xff] %v598
        %631 = vst [vmem:[#allocation2 + $0x58] sm:$0xff] %v599
        %632 = vst [vmem:[#allocation2 + $0x60] sm:$0xff] %v600
        %633 = vst [vmem:[#allocation2 + $0x68] sm:$0xff] %v601
        %634 = vst [vmem:[#allocation2 + $0x70] sm:$0xff] %v602
        %635 = vst [vmem:[#allocation2 + $0x78] sm:$0xff] %v603
        %636 = vst [vmem:[#allocation2 + $0x80] sm:$0xff] %v604
        %637 = vst [vmem:[#allocation2 + $0x88] sm:$0xff] %v605
        %638 = vst [vmem:[#allocation2 + $0x90] sm:$0xff] %v606
        %639 = vst [vmem:[#allocation2 + $0x98] sm:$0xff] %v607
        %640 = vst [vmem:[#allocation2 + $0xa0] sm:$0xff] %v608
        %641 = vst [vmem:[#allocation2 + $0xa8] sm:$0xff] %v609
        %642 = vst [vmem:[#allocation2 + $0xb0] sm:$0xff] %v610
        %643 = vst [vmem:[#allocation2 + $0xb8] sm:$0xff] %v611
        %644 = vst [vmem:[#allocation2 + $0xc0] sm:$0xff] %v612
        %645 = vst [vmem:[#allocation2 + $0xc8] sm:$0xff] %v613
        %646 = vst [vmem:[#allocation2 + $0xd0] sm:$0xff] %v614
        %647 = vst [vmem:[#allocation2 + $0xd8] sm:$0xff] %v615
        %648 = vst [vmem:[#allocation2 + $0xe0] sm:$0xff] %v616
        %649 = vst [vmem:[#allocation2 + $0xe8] sm:$0xff] %v617
        %650 = vst [vmem:[#allocation2 + $0xf0] sm:$0xff] %v618
        %651 = vst [vmem:[#allocation2 + $0xf8] sm:$0xff] %v619
        // Predicated region
        $region45: #{tpu_custom_call.1} parent=27 // pred_check
          %p652 = pneg %p234
        $region46: #{tpu_custom_call.1} parent=27 // pred_check_branch
          %654 = sbr.rel (%p652) target = $region48
        $region47: #{tpu_custom_call.1} parent=27 // pred_region
          %v655 = vld [vmem:[#allocation2] sm:$0xff]
          %v656 = vld [vmem:[#allocation2 + $0x8] sm:$0xff]
          %v657 = vld [vmem:[#allocation2 + $0x10] sm:$0xff]
          %v658 = vld [vmem:[#allocation2 + $0x18] sm:$0xff]
          %v659 = vld [vmem:[#allocation2 + $0x20] sm:$0xff]
          %v660 = vld [vmem:[#allocation2 + $0x28] sm:$0xff]
          %v661 = vld [vmem:[#allocation2 + $0x30] sm:$0xff]
          %v662 = vld [vmem:[#allocation2 + $0x38] sm:$0xff]
          %v663 = vld [vmem:[#allocation2 + $0x40] sm:$0xff]
          %v664 = vld [vmem:[#allocation2 + $0x48] sm:$0xff]
          %v665 = vld [vmem:[#allocation2 + $0x50] sm:$0xff]
          %v666 = vld [vmem:[#allocation2 + $0x58] sm:$0xff]
          %v667 = vld [vmem:[#allocation2 + $0x60] sm:$0xff]
          %v668 = vld [vmem:[#allocation2 + $0x68] sm:$0xff]
          %v669 = vld [vmem:[#allocation2 + $0x70] sm:$0xff]
          %v670 = vld [vmem:[#allocation2 + $0x78] sm:$0xff]
          %v671 = vld [vmem:[#allocation2 + $0x80] sm:$0xff]
          %v672 = vld [vmem:[#allocation2 + $0x88] sm:$0xff]
          %v673 = vld [vmem:[#allocation2 + $0x90] sm:$0xff]
          %v674 = vld [vmem:[#allocation2 + $0x98] sm:$0xff]
          %v675 = vld [vmem:[#allocation2 + $0xa0] sm:$0xff]
          %v676 = vld [vmem:[#allocation2 + $0xa8] sm:$0xff]
          %v677 = vld [vmem:[#allocation2 + $0xb0] sm:$0xff]
          %v678 = vld [vmem:[#allocation2 + $0xb8] sm:$0xff]
          %v679 = vld [vmem:[#allocation2 + $0xc0] sm:$0xff]
          %v680 = vld [vmem:[#allocation2 + $0xc8] sm:$0xff]
          %v681 = vld [vmem:[#allocation2 + $0xd0] sm:$0xff]
          %v682 = vld [vmem:[#allocation2 + $0xd8] sm:$0xff]
          %v683 = vld [vmem:[#allocation2 + $0xe0] sm:$0xff]
          %v684 = vld [vmem:[#allocation2 + $0xe8] sm:$0xff]
          %v685 = vld [vmem:[#allocation2 + $0xf0] sm:$0xff]
          %v686 = vld [vmem:[#allocation2 + $0xf8] sm:$0xff]
          %687 = vst [vmem:[%s227] sm:$0xff] %v655
          %688 = vst [vmem:[%s227 + $0x8] sm:$0xff] %v656
          %689 = vst [vmem:[%s227 + $0x10] sm:$0xff] %v657
          %690 = vst [vmem:[%s227 + $0x18] sm:$0xff] %v658
          %691 = vst [vmem:[%s227 + $0x20] sm:$0xff] %v659
          %692 = vst [vmem:[%s227 + $0x28] sm:$0xff] %v660
          %693 = vst [vmem:[%s227 + $0x30] sm:$0xff] %v661
          %694 = vst [vmem:[%s227 + $0x38] sm:$0xff] %v662
          %695 = vst [vmem:[%s227 + $0x40] sm:$0xff] %v663
          %696 = vst [vmem:[%s227 + $0x48] sm:$0xff] %v664
          %697 = vst [vmem:[%s227 + $0x50] sm:$0xff] %v665
          %698 = vst [vmem:[%s227 + $0x58] sm:$0xff] %v666
          %699 = vst [vmem:[%s227 + $0x60] sm:$0xff] %v667
          %700 = vst [vmem:[%s227 + $0x68] sm:$0xff] %v668
          %701 = vst [vmem:[%s227 + $0x70] sm:$0xff] %v669
          %702 = vst [vmem:[%s227 + $0x78] sm:$0xff] %v670
          %703 = vst [vmem:[%s227 + $0x80] sm:$0xff] %v671
          %704 = vst [vmem:[%s227 + $0x88] sm:$0xff] %v672
          %705 = vst [vmem:[%s227 + $0x90] sm:$0xff] %v673
          %706 = vst [vmem:[%s227 + $0x98] sm:$0xff] %v674
          %707 = vst [vmem:[%s227 + $0xa0] sm:$0xff] %v675
          %708 = vst [vmem:[%s227 + $0xa8] sm:$0xff] %v676
          %709 = vst [vmem:[%s227 + $0xb0] sm:$0xff] %v677
          %710 = vst [vmem:[%s227 + $0xb8] sm:$0xff] %v678
          %711 = vst [vmem:[%s227 + $0xc0] sm:$0xff] %v679
          %712 = vst [vmem:[%s227 + $0xc8] sm:$0xff] %v680
          %713 = vst [vmem:[%s227 + $0xd0] sm:$0xff] %v681
          %714 = vst [vmem:[%s227 + $0xd8] sm:$0xff] %v682
          %715 = vst [vmem:[%s227 + $0xe0] sm:$0xff] %v683
          %716 = vst [vmem:[%s227 + $0xe8] sm:$0xff] %v684
          %717 = vst [vmem:[%s227 + $0xf0] sm:$0xff] %v685
          %718 = vst [vmem:[%s227 + $0xf8] sm:$0xff] %v686
          %v719 = vadd.f32 %v655, %v656
          %v720 = vadd.f32 %v719, %v657
          %v721 = vadd.f32 %v720, %v658
          %v722 = vadd.f32 %v721, %v659
          %v723 = vadd.f32 %v722, %v660
          %v724 = vadd.f32 %v723, %v661
          %v725 = vadd.f32 %v724, %v662
          %v726 = vadd.f32 %v725, %v663
          %v727 = vadd.f32 %v726, %v664
          %v728 = vadd.f32 %v727, %v665
          %v729 = vadd.f32 %v728, %v666
          %v730 = vadd.f32 %v729, %v667
          %v731 = vadd.f32 %v730, %v668
          %v732 = vadd.f32 %v731, %v669
          %v733 = vadd.f32 %v732, %v670
          %v734 = vadd.f32 %v733, %v671
          %v735 = vadd.f32 %v734, %v672
          %v736 = vadd.f32 %v735, %v673
          %v737 = vadd.f32 %v736, %v674
          %v738 = vadd.f32 %v737, %v675
          %v739 = vadd.f32 %v738, %v676
          %v740 = vadd.f32 %v739, %v677
          %v741 = vadd.f32 %v740, %v678
          %v742 = vadd.f32 %v741, %v679
          %v743 = vadd.f32 %v742, %v680
          %v744 = vadd.f32 %v743, %v681
          %v745 = vadd.f32 %v744, %v682
          %v746 = vadd.f32 %v745, %v683
          %v747 = vadd.f32 %v746, %v684
          %v748 = vadd.f32 %v747, %v685
          %v749 = vadd.f32 %v748, %v686
          %v750 = vrot.slane %v749, 4
          %v751 = vadd.f32 %v749, %v750
          %v752 = vrot.slane %v751, 2
          %v753 = vadd.f32 %v751, %v752
          %v754 = vrot.slane %v753, 1
          %v755 = vadd.f32 %v753, %v754
          %v756 = vmul.f32 %v655, %v655
          %v757 = vmul.f32 %v656, %v656
          %v758 = vmul.f32 %v657, %v657
          %v759 = vmul.f32 %v658, %v658
          %v760 = vmul.f32 %v659, %v659
          %v761 = vmul.f32 %v660, %v660
          %v762 = vmul.f32 %v661, %v661
          %v763 = vmul.f32 %v662, %v662
          %v764 = vmul.f32 %v663, %v663
          %v765 = vmul.f32 %v664, %v664
          %v766 = vmul.f32 %v665, %v665
          %v767 = vmul.f32 %v666, %v666
          %v768 = vmul.f32 %v667, %v667
          %v769 = vmul.f32 %v668, %v668
          %v770 = vmul.f32 %v669, %v669
          %v771 = vmul.f32 %v670, %v670
          %v772 = vmul.f32 %v671, %v671
          %v773 = vmul.f32 %v672, %v672
          %v774 = vmul.f32 %v673, %v673
          %v775 = vmul.f32 %v674, %v674
          %v776 = vmul.f32 %v675, %v675
          %v777 = vmul.f32 %v676, %v676
          %v778 = vmul.f32 %v677, %v677
          %v779 = vmul.f32 %v678, %v678
          %v780 = vmul.f32 %v679, %v679
          %v781 = vmul.f32 %v680, %v680
          %v782 = vmul.f32 %v681, %v681
          %v783 = vmul.f32 %v682, %v682
          %v784 = vmul.f32 %v683, %v683
          %v785 = vmul.f32 %v684, %v684
          %v786 = vmul.f32 %v685, %v685
          %v787 = vmul.f32 %v686, %v686
          %v788 = vadd.f32 %v756, %v757
          %v789 = vadd.f32 %v788, %v758
          %v790 = vadd.f32 %v789, %v759
          %v791 = vadd.f32 %v790, %v760
          %v792 = vadd.f32 %v791, %v761
          %v793 = vadd.f32 %v792, %v762
          %v794 = vadd.f32 %v793, %v763
          %v795 = vadd.f32 %v794, %v764
          %v796 = vadd.f32 %v795, %v765
          %v797 = vadd.f32 %v796, %v766
          %v798 = vadd.f32 %v797, %v767
          %v799 = vadd.f32 %v798, %v768
          %v800 = vadd.f32 %v799, %v769
          %v801 = vadd.f32 %v800, %v770
          %v802 = vadd.f32 %v801, %v771
          %v803 = vadd.f32 %v802, %v772
          %v804 = vadd.f32 %v803, %v773
          %v805 = vadd.f32 %v804, %v774
          %v806 = vadd.f32 %v805, %v775
          %v807 = vadd.f32 %v806, %v776
          %v808 = vadd.f32 %v807, %v777
          %v809 = vadd.f32 %v808, %v778
          %v810 = vadd.f32 %v809, %v779
          %v811 = vadd.f32 %v810, %v780
          %v812 = vadd.f32 %v811, %v781
          %v813 = vadd.f32 %v812, %v782
          %v814 = vadd.f32 %v813, %v783
          %v815 = vadd.f32 %v814, %v784
          %v816 = vadd.f32 %v815, %v785
          %v817 = vadd.f32 %v816, %v786
          %v818 = vadd.f32 %v817, %v787
          %v819 = vrot.slane %v818, 4
          %v820 = vadd.f32 %v818, %v819
          %v821 = vrot.slane %v820, 2
          %v822 = vadd.f32 %v820, %v821
          %v823 = vrot.slane %v822, 1
          %v824 = vadd.f32 %v822, %v823
          %v825 = vld [vmem:[#allocation9] sm:$0x3]
          %vm826 = vcmask 1040384
          %v827 = vsel %vm826, %v755, %v824
          %v828 = vadd.f32 %v825, %v827
          %829 = vst [vmem:[#allocation9] sm:$0x3] %v828
        $region48: #{tpu_custom_call.1} parent=27 // pred_fallthru
          _
        %s830 = sand.u32 %s97, 1
        %s831 = scalar_lea.sflag [#allocation5], %s830
        %s832 = sand.u32 %s97, 1
        %s833 = smul.addr %s832, 256
        %s834 = scalar_lea.vmem [#allocation8], %s833
        // Predicated region
        $region49: #{tpu_custom_call.1} parent=27 // pred_check
          %p835 = pneg %p107
        $region50: #{tpu_custom_call.1} parent=27 // pred_check_branch
          %837 = sbr.rel (%p835) target = $region52
        $region51: #{tpu_custom_call.1} parent=27 // pred_region
          %s838 = smul.u32 32, %s27
          %840 = vsyncadd %s831, 0
          %s841 = smul.addr %s838, 8
          %s842 = scalar_lea.hbm %s2, %s841
          %s843 = sshll.u32 %s834, 4
          %s844 = int_to_ptr.vmem [resolvable:$true] %s843
          %s845 = sshll.u32 %s842, 4
          %s846 = int_to_ptr.hbm [resolvable:$true] %s845
          %851 = dma.vmem_to_hbm [thread:$0]  %s844, 4096, %s846, %s831, 128, 128, 8
        $region52: #{tpu_custom_call.1} parent=27 // pred_fallthru
          _
        // Predicated region
        $region53: #{tpu_custom_call.1} parent=27 // pred_check
          %p852 = pneg %p128
        $region54: #{tpu_custom_call.1} parent=27 // pred_check_branch
          %854 = sbr.rel (%p852) target = $region56
        $region55: #{tpu_custom_call.1} parent=27 // pred_region
          %856 = vsyncadd [#allocation10], 0
          %s858 = sshll.u32 [#allocation9], 4
          %s859 = int_to_ptr.vmem [resolvable:$true] %s858
          %s860 = sshll.u32 %s3, 4
          %s861 = int_to_ptr.hbm [resolvable:$true] %s860
          %863 = dma.vmem_to_hbm [thread:$0]  %s859, 32, %s861, [#allocation10]
        $region56: #{tpu_custom_call.1} parent=27 // pred_fallthru
          _
        // Predicated region
        $region57: #{tpu_custom_call.1} parent=27 // pred_check
          %p864 = pneg %p128
        $region58: #{tpu_custom_call.1} parent=27 // pred_check_branch
          %866 = sbr.rel (%p864) target = $region60
        $region59: #{tpu_custom_call.1} parent=27 // pred_region
          %868 = dma.done [#allocation10], 32
        $region60: #{tpu_custom_call.1} parent=27 // pred_fallthru
          _
      $region28: #{tpu_custom_call.1} parent=5 // pred_fallthru
        _
      %p869 = scmp.le.s32.totalorder 2, %s18
      // Predicated region
      $region61: #{tpu_custom_call.1} parent=5 // pred_check
        %p870 = pneg %p869
      $region62: #{tpu_custom_call.1} parent=5 // pred_check_branch
        %872 = sbr.rel (%p870) target = $region64
      $region63: #{tpu_custom_call.1} parent=5 // pred_region
        %s873 = ssub.s32 %s18, 2
        // Predicated region
        $region65: #{tpu_custom_call.1} parent=63 // pred_check
          %p874 = pneg %p113
        $region66: #{tpu_custom_call.1} parent=63 // pred_check_branch
          %876 = sbr.rel (%p874) target = $region68
        $region67: #{tpu_custom_call.1} parent=63 // pred_region
          %s877 = sand.u32 %s98, 1
          %s878 = scalar_lea.sflag [#allocation5], %s877
          %s879 = sand.u32 %s98, 1
          %s880 = smul.addr %s879, 256
          %s881 = scalar_lea.vmem [#allocation8], %s880
          %883 = dma.done %s878, 4096
        $region68: #{tpu_custom_call.1} parent=63 // pred_fallthru
          _
      $region64: #{tpu_custom_call.1} parent=5 // pred_fallthru
        _
    $region6: #{tpu_custom_call.1} parent=1 // loop_footer
      %s22 = sadd.s32 1, %s18
    $region7: #{tpu_custom_call.1} parent=1 // loop_footer_branch
      %17 = sbr.rel target = $region3
    $region8: #{tpu_custom_call.1} parent=1 // loop_exit
      _
    %884 = vsyncpa [#allocation4], 1
    %s885 = scalar_lea.sflag [#allocation4], 1
    %886 = vsyncpa %s885, 1
    %887 = vsyncpa [#allocation7], 1
    %888 = vsyncpa [#allocation5], 1
    %s889 = scalar_lea.sflag [#allocation5], 1
    %890 = vsyncpa %s889, 1
    %891 = vsyncpa [#allocation10], 1

</llo_original>
